<compile_context>
chip_gen: v7x
topology: tpu7x:2x2x1
jax: 0.10.0
libtpu: 0.0.40
codegen_flags: <defaults>
</compile_context>

<pallas_src>
import functools

import jax
import jax.numpy as jnp
import numpy as np
from jax.experimental import pallas as pl
from jax.experimental.pallas import tpu as pltpu


def _conv2d_bias_kernel(x_ref, w_ref, b_ref, o_ref, *, K, Wp):
    """One image per grid step; channels on sublanes, flat spatial on lanes.

    x_ref: (Cin, Lin)        zero-padded image, spatial flattened with row
                             stride Wp (plus one extra zero row of slack).
    w_ref: (Cout, K*K*Cin)   tap-major reshaped weights (pre-scaled by
                             weight_gain * act_gain), in x dtype.
    b_ref: (Cout, 1)         bias (pre-scaled by act_gain), float32.
    o_ref: (Cout, M)         M = H*Wp output span; within each Wp-wide row the
                             last (Wp-W) columns are junk, sliced off in the
                             wrapper.
    """
    M = o_ref.shape[-1]

    # Each filter tap (kh, kw) contributes x shifted by the constant flat
    # offset kh*Wp + kw: pure static lane-offset slices of the flattened
    # image, stacked along the contraction (sublane) axis -> (K*K*Cin, M).
    slabs = []
    for kh in range(K):
        for kw in range(K):
            s = kh * Wp + kw
            slabs.append(x_ref[:, s:s + M])
    xcat = jnp.concatenate(slabs, axis=0)

    # Single MXU matmul over the full K*K*Cin contraction; f32 accumulation.
    acc = jnp.dot(w_ref[...], xcat, preferred_element_type=jnp.float32)
    acc = acc + b_ref[...]              # (Cout, 1) f32 broadcast over lanes
    o_ref[...] = acc.astype(o_ref.dtype)


def conv2d_layer_forward(x_nchw, weight_oihw, bias, *, gain=1.0):
    """Equivalent of Conv2dLayer.forward (up=down=1, linear activation)."""
    N, Cin, H, W = x_nchw.shape
    Cout, _, K, _ = weight_oihw.shape
    pad = K // 2
    Wp = W + 2 * pad
    M = H * Wp                        # per-image output span (incl. junk cols)
    Lin = (H + 2 * pad + 1) * Wp      # +1 zero row of slack so the largest tap
                                      # shift (kh=kw=K-1) stays in bounds.

    weight_gain = 1.0 / float(np.sqrt(Cin * K * K))
    act_gain = 1.0 * float(gain)      # def_gain('linear') == 1
    # Fold weight_gain AND act_gain into weights/bias (exact for the linear
    # activation) so nothing runs after the kernel.  Gains applied in f32.
    # OIHW -> (Cout, K, K, Cin) -> (Cout, K*K*Cin): tap-major order matches
    # the slab stacking order inside the kernel.
    w_r = (jnp.transpose(weight_oihw, (0, 2, 3, 1)).astype(jnp.float32)
           * (weight_gain * act_gain)
           ).reshape(Cout, K * K * Cin).astype(x_nchw.dtype)
    b = (bias.astype(jnp.float32) * act_gain).reshape(Cout, 1)

    # Stay NCHW end-to-end: only a zero pad + free reshape on the input.
    x_pad = jnp.pad(x_nchw, ((0, 0), (0, 0), (pad, pad + 1), (pad, pad)))
    x_flat = x_pad.reshape(N, Cin, Lin)

    kernel = functools.partial(_conv2d_bias_kernel, K=K, Wp=Wp)
    out_flat = pl.pallas_call(
        kernel,
        out_shape=jax.ShapeDtypeStruct((N, Cout, M), x_nchw.dtype),
        grid_spec=pltpu.PrefetchScalarGridSpec(
            num_scalar_prefetch=0,
            grid=(N,),
            in_specs=[
                # one flattened padded image per grid step (batch squeezed)
                pl.BlockSpec((None, Cin, Lin), lambda n: (n, 0, 0)),
                # full weights / bias, constant index_map -> resident in VMEM
                pl.BlockSpec((Cout, K * K * Cin), lambda n: (0, 0)),
                pl.BlockSpec((Cout, 1), lambda n: (0, 0)),
            ],
            out_specs=pl.BlockSpec((None, Cout, M), lambda n: (n, 0, 0)),
        ),
        compiler_params=pltpu.CompilerParams(
            dimension_semantics=("parallel",),   # batch axis -> both v7x TCs
        ),
    )(x_flat, w_r, b)

    # Free reshape + narrow slice: drop the (Wp - W) junk columns per row.
    # Result is already NCHW — no output transpose, no post-kernel gain mul.
    return out_flat.reshape(N, Cout, H, Wp)[..., :W]


def _reference(x, weight, bias, gain=1.0):
    Cout, Cin, K, _ = weight.shape
    weight_gain = 1.0 / np.sqrt(Cin * K * K)
    y = jax.lax.conv_general_dilated(
        x,
        weight * weight_gain,
        window_strides=(1, 1),
        padding=[(K // 2, K // 2), (K // 2, K // 2)],
        dimension_numbers=("NCHW", "OIHW", "NCHW"),
    ) + bias.reshape(1, Cout, 1, 1)
    return y * gain


if __name__ == "__main__":
    # Module config: Conv2dLayer(in_channels=4, out_channels=8, kernel_size=3)
    N, Cin, H, W = 2, 4, 16, 16
    Cout, K = 8, 3

    key = jax.random.PRNGKey(0)
    kx, kw, kb = jax.random.split(key, 3)
    x = jax.random.normal(kx, (N, Cin, H, W), dtype=jnp.float32)
    # Deterministic stand-in for torch.randn weight init; bias zeros as in
    # Conv2dLayer.__init__.
    weight = jax.random.normal(kw, (Cout, Cin, K, K), dtype=jnp.float32)
    bias = jnp.zeros((Cout,), dtype=jnp.float32)

    y = conv2d_layer_forward(x, weight, bias)
    jax.block_until_ready(y)
    np.testing.assert_allclose(np.asarray(y), np.asarray(_reference(x, weight, bias)),
                               rtol=1e-4, atol=1e-4)
    assert y.shape == (N, Cout, H, W)

    # Exercise the bias / gain paths too (as if the params had been trained
    # and forward were called with gain != 1).
    bias2 = 0.1 * jax.random.normal(kb, (Cout,), dtype=jnp.float32)
    y2 = conv2d_layer_forward(x, weight, bias2, gain=2.0)
    jax.block_until_ready(y2)
    np.testing.assert_allclose(np.asarray(y2),
                               np.asarray(_reference(x, weight, bias2, gain=2.0)),
                               rtol=1e-4, atol=1e-4)

    print("KERNEL_OK")
</pallas_src>

<mosaic_0001>
module attributes {stable_mosaic.version = 11 : i64} {
  func.func @_conv2d_bias_kernel(%arg0: i32, %arg1: memref<1x4x342xf32, #tpu.memory_space<vmem>>, %arg2: memref<8x36xf32, #tpu.memory_space<vmem>>, %arg3: memref<8x1xf32, #tpu.memory_space<vmem>>, %arg4: memref<1x8x288xf32, #tpu.memory_space<vmem>>) attributes {dimension_semantics = [#tpu.dimension_semantics<parallel>], iteration_bounds = array<i64: 2>, scalar_prefetch = 0 : i64, scratch_operands = 0 : i64, tpu.core_type = #tpu.core_type<tc>, window_params = [{transform_indices = @transform_0, window_bounds = array<i64: 1, 4, 342>}, {pipeline_mode = #tpu.pipeline_mode<synchronous>, transform_indices = @transform_1, window_bounds = array<i64: 8, 36>}, {pipeline_mode = #tpu.pipeline_mode<synchronous>, transform_indices = @transform_2, window_bounds = array<i64: 8, 1>}, {transform_indices = @transform_3, window_bounds = array<i64: 1, 8, 288>}]} {
    %c0 = arith.constant 0 : index
    %c0_0 = arith.constant 0 : index
    %c0_1 = arith.constant 0 : index
    %0 = vector.load %arg1[%c0, %c0_0, %c0_1] : memref<1x4x342xf32, #tpu.memory_space<vmem>>, vector<1x4x288xf32>
    %1 = vector.shape_cast %0 : vector<1x4x288xf32> to vector<4x288xf32>
    %c0_2 = arith.constant 0 : index
    %c0_3 = arith.constant 0 : index
    %c1 = arith.constant 1 : index
    %2 = vector.load %arg1[%c0_2, %c0_3, %c1] : memref<1x4x342xf32, #tpu.memory_space<vmem>>, vector<1x4x288xf32>
    %3 = vector.shape_cast %2 : vector<1x4x288xf32> to vector<4x288xf32>
    %c0_4 = arith.constant 0 : index
    %c0_5 = arith.constant 0 : index
    %c2 = arith.constant 2 : index
    %4 = vector.load %arg1[%c0_4, %c0_5, %c2] : memref<1x4x342xf32, #tpu.memory_space<vmem>>, vector<1x4x288xf32>
    %5 = vector.shape_cast %4 : vector<1x4x288xf32> to vector<4x288xf32>
    %c0_6 = arith.constant 0 : index
    %c0_7 = arith.constant 0 : index
    %c18 = arith.constant 18 : index
    %6 = vector.load %arg1[%c0_6, %c0_7, %c18] : memref<1x4x342xf32, #tpu.memory_space<vmem>>, vector<1x4x288xf32>
    %7 = vector.shape_cast %6 : vector<1x4x288xf32> to vector<4x288xf32>
    %c0_8 = arith.constant 0 : index
    %c0_9 = arith.constant 0 : index
    %c19 = arith.constant 19 : index
    %8 = vector.load %arg1[%c0_8, %c0_9, %c19] : memref<1x4x342xf32, #tpu.memory_space<vmem>>, vector<1x4x288xf32>
    %9 = vector.shape_cast %8 : vector<1x4x288xf32> to vector<4x288xf32>
    %c0_10 = arith.constant 0 : index
    %c0_11 = arith.constant 0 : index
    %c20 = arith.constant 20 : index
    %10 = vector.load %arg1[%c0_10, %c0_11, %c20] : memref<1x4x342xf32, #tpu.memory_space<vmem>>, vector<1x4x288xf32>
    %11 = vector.shape_cast %10 : vector<1x4x288xf32> to vector<4x288xf32>
    %c0_12 = arith.constant 0 : index
    %c0_13 = arith.constant 0 : index
    %c36 = arith.constant 36 : index
    %12 = vector.load %arg1[%c0_12, %c0_13, %c36] : memref<1x4x342xf32, #tpu.memory_space<vmem>>, vector<1x4x288xf32>
    %13 = vector.shape_cast %12 : vector<1x4x288xf32> to vector<4x288xf32>
    %c0_14 = arith.constant 0 : index
    %c0_15 = arith.constant 0 : index
    %c37 = arith.constant 37 : index
    %14 = vector.load %arg1[%c0_14, %c0_15, %c37] : memref<1x4x342xf32, #tpu.memory_space<vmem>>, vector<1x4x288xf32>
    %15 = vector.shape_cast %14 : vector<1x4x288xf32> to vector<4x288xf32>
    %c0_16 = arith.constant 0 : index
    %c0_17 = arith.constant 0 : index
    %c38 = arith.constant 38 : index
    %16 = vector.load %arg1[%c0_16, %c0_17, %c38] : memref<1x4x342xf32, #tpu.memory_space<vmem>>, vector<1x4x288xf32>
    %17 = vector.shape_cast %16 : vector<1x4x288xf32> to vector<4x288xf32>
    %18 = tpu.concatenate %1, %3, %5, %7, %9, %11, %13, %15, %17 in 0 : vector<4x288xf32>, vector<4x288xf32>, vector<4x288xf32>, vector<4x288xf32>, vector<4x288xf32>, vector<4x288xf32>, vector<4x288xf32>, vector<4x288xf32>, vector<4x288xf32> -> vector<36x288xf32>
    %c0_18 = arith.constant 0 : index
    %c0_19 = arith.constant 0 : index
    %19 = vector.load %arg2[%c0_18, %c0_19] : memref<8x36xf32, #tpu.memory_space<vmem>>, vector<8x36xf32>
    %cst = arith.constant dense<0.000000e+00> : vector<8x288xf32>
    %20 = tpu.matmul %19, %18, %cst {dimension_numbers = #tpu.dot_dimension_numbers<[1], [0], [0], [1], [0, 0, 1, 1], [], []>} : vector<8x36xf32>, vector<36x288xf32>, vector<8x288xf32> -> vector<8x288xf32>
    %c0_20 = arith.constant 0 : index
    %c0_21 = arith.constant 0 : index
    %21 = vector.load %arg3[%c0_20, %c0_21] : memref<8x1xf32, #tpu.memory_space<vmem>>, vector<8x1xf32>
    %22 = vector.broadcast %21 : vector<8x1xf32> to vector<8x288xf32>
    %23 = arith.addf %20, %22 : vector<8x288xf32>
    %c0_22 = arith.constant 0 : index
    %c0_23 = arith.constant 0 : index
    %c0_24 = arith.constant 0 : index
    %24 = vector.load %arg4[%c0_22, %c0_23, %c0_24] : memref<1x8x288xf32, #tpu.memory_space<vmem>>, vector<1x8x288xf32>
    %25 = vector.shape_cast %24 : vector<1x8x288xf32> to vector<8x288xf32>
    %26 = vector.shape_cast %23 : vector<8x288xf32> to vector<1x8x288xf32>
    tpu.vector_store %arg4[%c0_22, %c0_23, %c0_24], %26 {strides = array<i32>} : memref<1x8x288xf32, #tpu.memory_space<vmem>>, vector<1x8x288xf32>,
    return
  }
  func.func @transform_0(%arg0: i32) -> (i32, i32, i32) {
    %c0_i32 = arith.constant 0 : i32
    %c0_i32_0 = arith.constant 0 : i32
    %c0_i32_1 = arith.constant 0 : i32
    return %arg0, %c0_i32, %c0_i32_0 : i32, i32, i32
  }
  func.func @transform_1(%arg0: i32) -> (i32, i32) {
    %c0_i32 = arith.constant 0 : i32
    %c0_i32_0 = arith.constant 0 : i32
    %c0_i32_1 = arith.constant 0 : i32
    return %c0_i32, %c0_i32_0 : i32, i32
  }
  func.func @transform_2(%arg0: i32) -> (i32, i32) {
    %c0_i32 = arith.constant 0 : i32
    %c0_i32_0 = arith.constant 0 : i32
    %c0_i32_1 = arith.constant 0 : i32
    return %c0_i32, %c0_i32_0 : i32, i32
  }
  func.func @transform_3(%arg0: i32) -> (i32, i32, i32) {
    %c0_i32 = arith.constant 0 : i32
    %c0_i32_0 = arith.constant 0 : i32
    %c0_i32_1 = arith.constant 0 : i32
    return %arg0, %c0_i32, %c0_i32_0 : i32, i32, i32
  }
}

</mosaic_0001>

<llo_original>
// kernel: tpu_custom_call.1
$region0: #{tpu_custom_call.1}
  #allocation0 [shape = 'u32[]', space=smem, size = 0x4, offset = 0x4, fixed_abs, tag = 'smem constant byte address 0x4 - core index']
  #allocation1 [shape = 'u32[144,128]{1,0:T(1,128)}', space=vmem, size = 0x12000, scoped, tag = 'internal scratch']
  %s0 = inlined_call_operand.hbm [shape: f32[2,4,342], index: 0, kind: input, shape index: {}]
  %s1 = inlined_call_operand.vmem [shape: f32[8,36], index: 1, kind: input, shape index: {}]
  %s2 = inlined_call_operand.vmem [shape: f32[8,1], index: 2, kind: input, shape index: {}]
  %s3 = inlined_call_operand.hbm [shape: f32[2,8,288], index: 3, kind: output, shape index: {}]
  %s4 = sld [smem:[#allocation0]]
  $region49: #{tpu_custom_call.1} parent=0
    _
  %s6 = ssub.s32 1, %s4
  %s7 = scalar_select 0, %s6, %s4
  $region1: #{tpu_custom_call.1} parent=0
    #allocation2 [shape = 'u8[12288]{0}', space=vmem, size = 0x3000, scoped, tag = 'input window, operand 0']
    #allocation3 [shape = 's32[2]{0}', space=sflag, size = 0x8, scoped, tag = 'scoped memory for tpu_custom_call.1']
    #allocation4 [shape = 's32[2]{0}', space=sflag, size = 0x8, scoped, tag = 'scoped memory for tpu_custom_call.1']
    #allocation5 [shape = 'u8[24576]{0}', space=vmem, size = 0x6000, scoped, tag = 'output window, operand 0']
    %8 = vsyncpa [#allocation3], 0
    %s9 = scalar_lea.sflag [#allocation3], 1
    %10 = vsyncpa %s9, 0
    %11 = vsyncpa [#allocation4], 0
    %s12 = scalar_lea.sflag [#allocation4], 1
    %13 = vsyncpa %s12, 0
    loop: start=0, step=1, limit=4
    $region2: #{tpu_custom_call.1} parent=1 // loop_pre_header
      _
    $region3: #{tpu_custom_call.1} parent=1 // loop_header
      %s15 = sphi 0, %s19
      %p16 = scmp.ge.s32.totalorder %s15, 4
      %s25 = sphi 0, %s27
      %s28 = sphi 0, %s25
      %s29 = sphi 0, %s28
      %s45 = sphi 0, %s29
      %s49 = sphi 0, %s49
      %s51 = sphi 0, %s49
      %s52 = sphi 0, %s51
      %s66 = sphi 0, %s52
      %s70 = sphi 0, %s70
      %s72 = sphi 0, %s70
      %s73 = sphi 0, %s72
      %s87 = sphi 0, %s73
      %s93 = sphi 0, %s95
      %s96 = sphi 0, %s93
      %s97 = sphi 0, %s96
      %s113 = sphi 0, %s97
    $region4: #{tpu_custom_call.1} parent=1 // loop_header_branch
      %18 = sbr.rel (%p16) target = $region8
    $region5: #{tpu_custom_call.1} parent=1 // loop_body
      %s20 = ssub.s32 %s15, 1
      %s21 = ssub.s32 %s15, 2
      %s22 = sadd.s32 %s15, 1
      %s23 = ssub.s32 %s15, %s22
      %p24 = scmp.eq.s32.totalorder %s23, 0
      %s26 = sadd.s32 %s25, 1
      %s27 = scalar_select %p24, %s25, %s26
      %p30 = pneg %p24
      %p31 = scmp.eq.s32.totalorder %s15, 1
      %p32 = por %p30, %p31
      %p33 = scmp.ne.s32.totalorder %s25, %s28
      %p34 = scmp.eq.s32.totalorder %s15, 0
      %p35 = por %p33, %p34
      %p36 = scmp.ne.s32.totalorder %s25, %s28
      %p37 = scmp.eq.s32.totalorder %s20, 1
      %p38 = por %p36, %p37
      %p39 = scmp.ne.s32.totalorder %s28, %s29
      %p40 = scmp.eq.s32.totalorder %s20, 0
      %p41 = por %p39, %p40
      %p42 = scmp.ne.s32.totalorder %s28, %s29
      %p43 = scmp.eq.s32.totalorder %s21, 1
      %p44 = por %p42, %p43
      %p46 = scmp.ne.s32.totalorder %s29, %s45
      %p47 = scmp.eq.s32.totalorder %s21, 0
      %p48 = por %p46, %p47
      %s50 = sadd.s32 %s49, 1
      %p53 = scmp.eq.s32.totalorder %s15, 1
      %p54 = scmp.ne.s32.totalorder %s49, %s51
      %p55 = scmp.eq.s32.totalorder %s15, 0
      %p56 = por %p54, %p55
      %p57 = scmp.ne.s32.totalorder %s49, %s51
      %p58 = scmp.eq.s32.totalorder %s20, 1
      %p59 = por %p57, %p58
      %p60 = scmp.ne.s32.totalorder %s51, %s52
      %p61 = scmp.eq.s32.totalorder %s20, 0
      %p62 = por %p60, %p61
      %p63 = scmp.ne.s32.totalorder %s51, %s52
      %p64 = scmp.eq.s32.totalorder %s21, 1
      %p65 = por %p63, %p64
      %p67 = scmp.ne.s32.totalorder %s52, %s66
      %p68 = scmp.eq.s32.totalorder %s21, 0
      %p69 = por %p67, %p68
      %s71 = sadd.s32 %s70, 1
      %p74 = scmp.eq.s32.totalorder %s15, 1
      %p75 = scmp.ne.s32.totalorder %s70, %s72
      %p76 = scmp.eq.s32.totalorder %s15, 0
      %p77 = por %p75, %p76
      %p78 = scmp.ne.s32.totalorder %s70, %s72
      %p79 = scmp.eq.s32.totalorder %s20, 1
      %p80 = por %p78, %p79
      %p81 = scmp.ne.s32.totalorder %s72, %s73
      %p82 = scmp.eq.s32.totalorder %s20, 0
      %p83 = por %p81, %p82
      %p84 = scmp.ne.s32.totalorder %s72, %s73
      %p85 = scmp.eq.s32.totalorder %s21, 1
      %p86 = por %p84, %p85
      %p88 = scmp.ne.s32.totalorder %s73, %s87
      %p89 = scmp.eq.s32.totalorder %s21, 0
      %p90 = por %p88, %p89
      %s91 = ssub.s32 %s15, %s22
      %p92 = scmp.eq.s32.totalorder %s91, 0
      %s94 = sadd.s32 %s93, 1
      %s95 = scalar_select %p92, %s93, %s94
      %p98 = pneg %p92
      %p99 = scmp.eq.s32.totalorder %s15, 1
      %p100 = por %p98, %p99
      %p101 = scmp.ne.s32.totalorder %s93, %s96
      %p102 = scmp.eq.s32.totalorder %s15, 0
      %p103 = por %p101, %p102
      %p104 = scmp.ne.s32.totalorder %s93, %s96
      %p105 = scmp.eq.s32.totalorder %s20, 1
      %p106 = por %p104, %p105
      %p107 = scmp.ne.s32.totalorder %s96, %s97
      %p108 = scmp.eq.s32.totalorder %s20, 0
      %p109 = por %p107, %p108
      %p110 = scmp.ne.s32.totalorder %s96, %s97
      %p111 = scmp.eq.s32.totalorder %s21, 1
      %p112 = por %p110, %p111
      %p114 = scmp.ne.s32.totalorder %s97, %s113
      %p115 = scmp.eq.s32.totalorder %s21, 0
      %p116 = por %p114, %p115
      %p117 = scmp.le.s32.totalorder 1, %s15
      %p118 = scmp.lt.s32.totalorder %s15, 3
      %p119 = pnand %p117, %p118
      %p120 = pneg %p119
      // Predicated region
      $region9: #{tpu_custom_call.1} parent=5 // pred_check
        _
      $region10: #{tpu_custom_call.1} parent=5 // pred_check_branch
        %122 = sbr.rel (%p119) target = $region12
      $region11: #{tpu_custom_call.1} parent=5 // pred_region
        %s123 = ssub.s32 %s15, 1
        // Predicated region
        $region13: #{tpu_custom_call.1} parent=11 // pred_check
          %p124 = pneg %p62
        $region14: #{tpu_custom_call.1} parent=11 // pred_check_branch
          %126 = sbr.rel (%p124) target = $region16
        $region15: #{tpu_custom_call.1} parent=11 // pred_region
          _
        $region16: #{tpu_custom_call.1} parent=11 // pred_fallthru
          _
        // Predicated region
        $region17: #{tpu_custom_call.1} parent=11 // pred_check
          %p127 = pneg %p83
        $region18: #{tpu_custom_call.1} parent=11 // pred_check_branch
          %129 = sbr.rel (%p127) target = $region20
        $region19: #{tpu_custom_call.1} parent=11 // pred_region
          _
        $region20: #{tpu_custom_call.1} parent=11 // pred_fallthru
          _
      $region12: #{tpu_custom_call.1} parent=5 // pred_fallthru
        _
      %p130 = scmp.lt.s32.totalorder %s15, 2
      // Predicated region
      $region21: #{tpu_custom_call.1} parent=5 // pred_check
        %p131 = pneg %p130
      $region22: #{tpu_custom_call.1} parent=5 // pred_check_branch
        %133 = sbr.rel (%p131) target = $region24
      $region23: #{tpu_custom_call.1} parent=5 // pred_region
        // Predicated region
        $region25: #{tpu_custom_call.1} parent=23 // pred_check
          %p134 = pneg %p35
        $region26: #{tpu_custom_call.1} parent=23 // pred_check_branch
          %136 = sbr.rel (%p134) target = $region28
        $region27: #{tpu_custom_call.1} parent=23 // pred_region
          %s137 = sand.u32 %s25, 1
          %s138 = scalar_lea.sflag [#allocation3], %s137
          %s139 = sand.u32 %s25, 1
          %s140 = smul.addr %s139, 12
          %s141 = scalar_lea.vmem [#allocation2], %s140
          %s143 = ssub.s32 192, 192
          %144 = vsyncadd %s138, %s143
          %s145 = smul.addr %s15, 3
          %s146 = smul.addr %s145, 64
          %s147 = scalar_lea.hbm %s0, %s146
          %s149 = sshll.u32 %s141, 4
          %s150 = int_to_ptr.vmem [resolvable:$true] %s149
          %152 = dma.hbm_to_vmem [thread:$0]  %s147, 192, %s150, %s138
        $region28: #{tpu_custom_call.1} parent=23 // pred_fallthru
          _
      $region24: #{tpu_custom_call.1} parent=5 // pred_fallthru
        _
      %p153 = scmp.le.s32.totalorder 1, %s15
      %p154 = scmp.lt.s32.totalorder %s15, 3
      %p155 = pnand %p153, %p154
      %p156 = pneg %p155
      // Predicated region
      $region29: #{tpu_custom_call.1} parent=5 // pred_check
        _
      $region30: #{tpu_custom_call.1} parent=5 // pred_check_branch
        %158 = sbr.rel (%p155) target = $region32
      $region31: #{tpu_custom_call.1} parent=5 // pred_region
        %s159 = ssub.s32 %s15, 1
        %s160 = sand.u32 %s28, 1
        %s161 = scalar_lea.sflag [#allocation3], %s160
        %s162 = sand.u32 %s28, 1
        %s163 = smul.addr %s162, 12
        %s164 = scalar_lea.vmem [#allocation2], %s163
        // Predicated region
        $region33: #{tpu_custom_call.1} parent=31 // pred_check
          %p165 = pneg %p41
        $region34: #{tpu_custom_call.1} parent=31 // pred_check_branch
          %167 = sbr.rel (%p165) target = $region36
        $region35: #{tpu_custom_call.1} parent=31 // pred_region
          %168 = dma.done %s161, 192
        $region36: #{tpu_custom_call.1} parent=31 // pred_fallthru
          _
        %s169 = sand.u32 %s28, 1
        %s170 = scalar_lea.sflag [#allocation3], %s169
        %s171 = sand.u32 %s28, 1
        %s172 = smul.addr %s171, 12
        %s173 = scalar_lea.vmem [#allocation2], %s172
        %p174 = pneg %p41
        %p175 = pneg %p38
        %p176 = pneg %p62
        %p177 = pneg %p59
        %p178 = pneg %p83
        %p179 = pneg %p80
        %p180 = pneg %p109
        %p181 = pneg %p106
        %s182 = sand.u32 %s96, 1
        %s183 = scalar_lea.sflag [#allocation4], %s182
        %s184 = sand.u32 %s96, 1
        %s185 = smul.addr %s184, 24
        %s186 = scalar_lea.vmem [#allocation5], %s185
        %v187 = vld [vmem:[%s164] sm:$0xff]
        %v188 = vld [vmem:[%s164 + $0x8] sm:$0xf]
        %v191 = vcombine.high %v187, %v187
        %v193 = vcombine.low %v187, %v187
        %v194 = vcombine.low %v188, %v188
        %195 = vrot.lane.b32.xlu0 %v193, 127
        %v196 = vpop.permute.xlu0 %195
        %197 = vrot.lane.b32.xlu0 %v187, 127
        %v198 = vpop.permute.xlu0 %197
        %199 = vrot.lane.b32.xlu0 %v194, 127
        %v200 = vpop.permute.xlu0 %199
        %vm201 = vcmask 1039360
        %v202 = vsel %vm201, %v196, %v198
        %v203 = vsel %vm201, %v198, %v200
        %207 = vrot.lane.b32.xlu0 %v187, 126
        %v208 = vpop.permute.xlu0 %207
        %209 = vrot.lane.b32.xlu0 %v191, 126
        %v210 = vpop.permute.xlu0 %209
        %211 = vrot.lane.b32.xlu0 %v188, 126
        %v212 = vpop.permute.xlu0 %211
        %vm213 = vcmask 1031168
        %v214 = vsel %vm213, %v208, %v210
        %v215 = vsel %vm213, %v210, %v212
        %219 = vrot.lane.b32.xlu0 %v193, 110
        %v220 = vpop.permute.xlu0 %219
        %221 = vrot.lane.b32.xlu0 %v187, 110
        %v222 = vpop.permute.xlu0 %221
        %223 = vrot.lane.b32.xlu0 %v194, 110
        %v224 = vpop.permute.xlu0 %223
        %vm225 = vcmask 900096
        %v226 = vsel %vm225, %v220, %v222
        %v227 = vsel %vm225, %v222, %v224
        %231 = vrot.lane.b32.xlu0 %v187, 109
        %v232 = vpop.permute.xlu0 %231
        %233 = vrot.lane.b32.xlu0 %v191, 109
        %v234 = vpop.permute.xlu0 %233
        %235 = vrot.lane.b32.xlu0 %v188, 109
        %v236 = vpop.permute.xlu0 %235
        %vm237 = vcmask 891904
        %v238 = vsel %vm237, %v232, %v234
        %v239 = vsel %vm237, %v234, %v236
        %243 = vrot.lane.b32.xlu0 %v193, 108
        %v244 = vpop.permute.xlu0 %243
        %245 = vrot.lane.b32.xlu0 %v187, 108
        %v246 = vpop.permute.xlu0 %245
        %247 = vrot.lane.b32.xlu0 %v194, 108
        %v248 = vpop.permute.xlu0 %247
        %vm249 = vcmask 883712
        %v250 = vsel %vm249, %v244, %v246
        %v251 = vsel %vm249, %v246, %v248
        %255 = vrot.lane.b32.xlu0 %v187, 92
        %v256 = vpop.permute.xlu0 %255
        %257 = vrot.lane.b32.xlu0 %v191, 92
        %v258 = vpop.permute.xlu0 %257
        %259 = vrot.lane.b32.xlu0 %v188, 92
        %v260 = vpop.permute.xlu0 %259
        %vm261 = vcmask 752640
        %v262 = vsel %vm261, %v256, %v258
        %v263 = vsel %vm261, %v258, %v260
        %267 = vrot.lane.b32.xlu0 %v193, 91
        %v268 = vpop.permute.xlu0 %267
        %269 = vrot.lane.b32.xlu0 %v187, 91
        %v270 = vpop.permute.xlu0 %269
        %271 = vrot.lane.b32.xlu0 %v194, 91
        %v272 = vpop.permute.xlu0 %271
        %vm273 = vcmask 744448
        %v274 = vsel %vm273, %v268, %v270
        %v275 = vsel %vm273, %v270, %v272
        %279 = vrot.lane.b32.xlu0 %v187, 90
        %v280 = vpop.permute.xlu0 %279
        %281 = vrot.lane.b32.xlu0 %v191, 90
        %v282 = vpop.permute.xlu0 %281
        %283 = vrot.lane.b32.xlu0 %v188, 90
        %v284 = vpop.permute.xlu0 %283
        %vm285 = vcmask 736256
        %v286 = vsel %vm285, %v280, %v282
        %v287 = vsel %vm285, %v282, %v284
        %vm288 = vcmask 1043456
        %v289 = vsel %vm288, %v187, %v202
        %v290 = vsel %vm288, %v191, %v203
        %v291 = vsel %vm288, %v188, %v200
        %v292 = vsel %vm288, %v214, %v226
        %v293 = vsel %vm288, %v215, %v227
        %v294 = vsel %vm288, %v212, %v224
        %v295 = vsel %vm288, %v238, %v250
        %v296 = vsel %vm288, %v239, %v251
        %v297 = vsel %vm288, %v236, %v248
        %v298 = vsel %vm288, %v262, %v274
        %v299 = vsel %vm288, %v263, %v275
        %v300 = vsel %vm288, %v260, %v272
        %v301 = vld [vmem:[%s1] sm:$0xff]
        %v302 = vld [vmem:[%s2] sm:$0xff]
        %304 = vset.pattern.permute.xlu0 0
        %305 = vperm.xlu0 %304, %v302
        %v306 = vpop.permute.xlu0 %305
        %vm308 = vcmask 293888
        %v310 = vsel %vm308, %v301, 0
        %v312 = vsel %vm288, %v286, 0
        %v314 = vsel %vm288, %v287, 0
        %v316 = vsel %vm288, %v284, 0
        %318 = vmatprep.subr.mxu0 %v290
        %319 = vmatpush1.msra.mxu0 %v289
        %320 = vmatprep.subr.mxu0 %v293
        %321 = vmatpush1.msra.mxu0 %v292
        %322 = vmatprep.subr.mxu0 %v296
        %323 = vmatpush1.msra.mxu0 %v295
        %324 = vmatprep.subr.mxu0 %v299
        %325 = vmatpush1.msra.mxu0 %v298
        %326 = vmatprep.subr.mxu0 %v314
        %327 = vmatpush1.msra.mxu0 %v312
        %328 = vmatprep.subr.mxu0 0.0
        %329 = vmatpush1.msra.mxu0 0.0
        %330 = vmatprep.subr.mxu0 0.0
        %331 = vmatpush1.msra.mxu0 0.0
        %332 = vmatprep.subr.mxu0 0.0
        %333 = vmatpush1.msra.mxu0 0.0
        %334 = vmatprep.subr.mxu0 0.0
        %335 = vmatpush1.msra.mxu0 0.0
        %336 = vmatprep.subr.mxu0 0.0
        %337 = vmatpush1.msra.mxu0 0.0
        %338 = vmatprep.subr.mxu0 0.0
        %339 = vmatpush1.msra.mxu0 0.0
        %340 = vmatprep.subr.mxu0 0.0
        %341 = vmatpush1.msra.mxu0 0.0
        %342 = vmatprep.subr.mxu0 0.0
        %343 = vmatpush1.msra.mxu0 0.0
        %344 = vmatprep.subr.mxu0 0.0
        %345 = vmatpush1.msra.mxu0 0.0
        %346 = vmatprep.subr.mxu0 0.0
        %347 = vmatpush1.msra.mxu0 0.0
        %348 = vmatprep.subr.mxu0 0.0
        %349 = vmatpush1.msra.mxu0 0.0
        %350 = vmatprep.subr.mxu0 0.0
        %351 = vmatpush1.msra.mxu0 0.0
        %352 = vmatprep.subr.mxu0 0.0
        %353 = vmatpush1.msra.mxu0 0.0
        %354 = vmatprep.subr.mxu0 0.0
        %355 = vmatpush1.msra.mxu0 0.0
        %356 = vmatprep.subr.mxu0 0.0
        %357 = vmatpush1.msra.mxu0 0.0
        %358 = vmatprep.subr.mxu0 0.0
        %359 = vmatpush1.msra.mxu0 0.0
        %360 = vmatprep.subr.mxu0 0.0
        %361 = vmatpush1.msra.mxu0 0.0
        %362 = vmatprep.subr.mxu0 0.0
        %363 = vmatpush1.msra.mxu0 0.0
        %364 = vmatprep.subr.mxu0 0.0
        %365 = vmatpush1.msra.mxu0 0.0
        %366 = vmatprep.subr.mxu0 0.0
        %367 = vmatpush1.msra.mxu0 0.0
        %368 = vmatprep.subr.mxu0 0.0
        %369 = vmatpush1.msra.mxu0 0.0
        %370 = vmatprep.subr.mxu0 0.0
        %371 = vmatpush1.msra.mxu0 0.0
        %372 = vmatprep.subr.mxu0 0.0
        %373 = vmatpush1.msra.mxu0 0.0
        %374 = vmatprep.subr.mxu0 0.0
        %375 = vmatpush1.msra.mxu0 0.0
        %376 = vmatprep.subr.mxu0 0.0
        %377 = vmatpush1.msra.mxu0 0.0
        %378 = vmatprep.subr.mxu0 0.0
        %379 = vmatpush1.msra.mxu0 0.0
        %380 = vmatprep.subr.mxu0 0.0
        %381 = vmatpush1.msra.mxu0 0.0
        %382 = vmatprep.mubr.f32.mxu0 0.0
        %383 = vmatmul.mubr.f32.gmra.mrb[0].mxu0 %v310
        %v384 = vpop.f32.mrb[0].mxu0
        %v385 = vadd.f32 %v306, %v384
        %v386 = vpop.f32.mrb[0].mxu0
        %v387 = vadd.f32 %v306, %v386
        %388 = vdwg.mxu0
        %389 = vmatprep.subr.mxu0 0.0
        %390 = vmatpush1.msra.mxu0 %v291
        %391 = vmatprep.subr.mxu0 0.0
        %392 = vmatpush1.msra.mxu0 %v294
        %393 = vmatprep.subr.mxu0 0.0
        %394 = vmatpush1.msra.mxu0 %v297
        %395 = vmatprep.subr.mxu0 0.0
        %396 = vmatpush1.msra.mxu0 %v300
        %397 = vmatprep.subr.mxu0 0.0
        %398 = vmatpush1.msra.mxu0 %v316
        %399 = vmatprep.subr.mxu0 0.0
        %400 = vmatpush1.msra.mxu0 0.0
        %401 = vmatprep.subr.mxu0 0.0
        %402 = vmatpush1.msra.mxu0 0.0
        %403 = vmatprep.subr.mxu0 0.0
        %404 = vmatpush1.msra.mxu0 0.0
        %405 = vmatprep.subr.mxu0 0.0
        %406 = vmatpush1.msra.mxu0 0.0
        %407 = vmatprep.subr.mxu0 0.0
        %408 = vmatpush1.msra.mxu0 0.0
        %409 = vmatprep.subr.mxu0 0.0
        %410 = vmatpush1.msra.mxu0 0.0
        %411 = vmatprep.subr.mxu0 0.0
        %412 = vmatpush1.msra.mxu0 0.0
        %413 = vmatprep.subr.mxu0 0.0
        %414 = vmatpush1.msra.mxu0 0.0
        %415 = vmatprep.subr.mxu0 0.0
        %416 = vmatpush1.msra.mxu0 0.0
        %417 = vmatprep.subr.mxu0 0.0
        %418 = vmatpush1.msra.mxu0 0.0
        %419 = vmatprep.subr.mxu0 0.0
        %420 = vmatpush1.msra.mxu0 0.0
        %421 = vmatprep.subr.mxu0 0.0
        %422 = vmatpush1.msra.mxu0 0.0
        %423 = vmatprep.subr.mxu0 0.0
        %424 = vmatpush1.msra.mxu0 0.0
        %425 = vmatprep.subr.mxu0 0.0
        %426 = vmatpush1.msra.mxu0 0.0
        %427 = vmatprep.subr.mxu0 0.0
        %428 = vmatpush1.msra.mxu0 0.0
        %429 = vmatprep.subr.mxu0 0.0
        %430 = vmatpush1.msra.mxu0 0.0
        %431 = vmatprep.subr.mxu0 0.0
        %432 = vmatpush1.msra.mxu0 0.0
        %433 = vmatprep.subr.mxu0 0.0
        %434 = vmatpush1.msra.mxu0 0.0
        %435 = vmatprep.subr.mxu0 0.0
        %436 = vmatpush1.msra.mxu0 0.0
        %437 = vmatprep.subr.mxu0 0.0
        %438 = vmatpush1.msra.mxu0 0.0
        %439 = vmatprep.subr.mxu0 0.0
        %440 = vmatpush1.msra.mxu0 0.0
        %441 = vmatprep.subr.mxu0 0.0
        %442 = vmatpush1.msra.mxu0 0.0
        %443 = vmatprep.subr.mxu0 0.0
        %444 = vmatpush1.msra.mxu0 0.0
        %445 = vmatprep.subr.mxu0 0.0
        %446 = vmatpush1.msra.mxu0 0.0
        %447 = vmatprep.subr.mxu0 0.0
        %448 = vmatpush1.msra.mxu0 0.0
        %449 = vmatprep.subr.mxu0 0.0
        %450 = vmatpush1.msra.mxu0 0.0
        %451 = vmatprep.subr.mxu0 0.0
        %452 = vmatpush1.msra.mxu0 0.0
        %453 = vmatprep.mubr.f32.mxu0 0.0
        %454 = vmatmul.mubr.f32.gmra.mrb[0].mxu0 %v310
        %v455 = vpop.f32.mrb[0].mxu0
        %v456 = vadd.f32 %v306, %v455
        %v457 = vpop.f32.mrb[0].mxu0
        %458 = vdwg.mxu0
        %459 = vst [vmem:[%s186] sm:$0xff] %v385
        %460 = vst [vmem:[%s186 + $0x8] sm:$0xff] %v387
        %vm461 = vcmask 261120
        %462 = vst.msk [vmem:[%s186 + $0x10] sm:$0xff] %vm461, %v456
        %s463 = sand.u32 %s96, 1
        %s464 = scalar_lea.sflag [#allocation4], %s463
        %s465 = sand.u32 %s96, 1
        %s466 = smul.addr %s465, 24
        %s467 = scalar_lea.vmem [#allocation5], %s466
        // Predicated region
        $region37: #{tpu_custom_call.1} parent=31 // pred_check
          %p468 = pneg %p106
        $region38: #{tpu_custom_call.1} parent=31 // pred_check_branch
          %470 = sbr.rel (%p468) target = $region40
        $region39: #{tpu_custom_call.1} parent=31 // pred_region
          %s472 = ssub.s32 384, 384
          %473 = vsyncadd %s464, %s472
          %s474 = smul.addr %s20, 3
          %s475 = smul.addr %s474, 128
          %s476 = scalar_lea.hbm %s3, %s475
          %s478 = sshll.u32 %s467, 4
          %s479 = int_to_ptr.vmem [resolvable:$true] %s478
          %481 = dma.vmem_to_hbm [thread:$0]  %s479, 384, %s476, %s464
        $region40: #{tpu_custom_call.1} parent=31 // pred_fallthru
          _
      $region32: #{tpu_custom_call.1} parent=5 // pred_fallthru
        _
      %p482 = scmp.le.s32.totalorder 2, %s15
      // Predicated region
      $region41: #{tpu_custom_call.1} parent=5 // pred_check
        %p483 = pneg %p482
      $region42: #{tpu_custom_call.1} parent=5 // pred_check_branch
        %485 = sbr.rel (%p483) target = $region44
      $region43: #{tpu_custom_call.1} parent=5 // pred_region
        %s486 = ssub.s32 %s15, 2
        // Predicated region
        $region45: #{tpu_custom_call.1} parent=43 // pred_check
          %p487 = pneg %p112
        $region46: #{tpu_custom_call.1} parent=43 // pred_check_branch
          %489 = sbr.rel (%p487) target = $region48
        $region47: #{tpu_custom_call.1} parent=43 // pred_region
          %s490 = sand.u32 %s97, 1
          %s491 = scalar_lea.sflag [#allocation4], %s490
          %s492 = sand.u32 %s97, 1
          %s493 = smul.addr %s492, 24
          %s494 = scalar_lea.vmem [#allocation5], %s493
          %495 = dma.done %s491, 384
        $region48: #{tpu_custom_call.1} parent=43 // pred_fallthru
          _
      $region44: #{tpu_custom_call.1} parent=5 // pred_fallthru
        _
    $region6: #{tpu_custom_call.1} parent=1 // loop_footer
      %s19 = sadd.s32 1, %s15
    $region7: #{tpu_custom_call.1} parent=1 // loop_footer_branch
      %14 = sbr.rel target = $region3
    $region8: #{tpu_custom_call.1} parent=1 // loop_exit
      _
    %496 = vsyncpa [#allocation3], 1
    %s497 = scalar_lea.sflag [#allocation3], 1
    %498 = vsyncpa %s497, 1
    %499 = vsyncpa [#allocation4], 1
    %s500 = scalar_lea.sflag [#allocation4], 1
    %501 = vsyncpa %s500, 1

</llo_original>
